<compile_context>
chip_gen: v6e
topology: v6e:2x2x1
jax: 0.10.0
libtpu: 0.0.40
codegen_flags: <defaults>
</compile_context>

<pallas_src>
import jax
import jax.numpy as jnp
from jax import lax
from jax.experimental import pallas as pl
from jax.experimental.pallas import tpu as pltpu


def _round_up(n, m):
    return ((n + m - 1) // m) * m


def _lane_pad(n, multiple=None):
    if multiple is None:
        # v6e/v7x MXUs are 256x256: pad large dims to 256 so the matmul N/K
        # dims fill the systolic array; tiny dims stay at the 128-lane minimum
        # (less padding traffic; v5e's 128x128 MXU is already matched by 128).
        multiple = 256 if n > 128 else 128
    return _round_up(max(n, 1), multiple)


# ---------------------------------------------------------------------------
# Kernel
# ---------------------------------------------------------------------------
def nearest_center_kernel(x_ref, ct_ref, cn_ref, cv_ref, o_ref):
    x = x_ref[...]                      # (TB, C)   f32 batch tile
    ct = ct_ref[...]                    # (C,  Gp)  f32 (-2*centers)^T, zero padded
    cn = cn_ref[...]                    # (1,  Gp)  f32 ||c||^2, FLT_MAX padded
    cv = cv_ref[...]                    # (Gp, Mp)  f32 center_values^T, zero padded

    # Squared distance up to a per-row constant:  ||c||^2 - 2 x.c.
    # The -2 is folded into ct at prepare_params() time, so this is a single
    # MXU matmul plus a broadcast add.  Padded (fake) centers carry FLT_MAX
    # norms and exactly-zero ct columns, so their score is exactly FLT_MAX and
    # they never beat a real center (ties resolve to the lower = real index).
    # Mosaic keeps f32 dot operands in f32 (no implicit bf16 demotion), so the
    # ordering matches the f32 reference.
    score = cn + jnp.dot(x, ct, preferred_element_type=jnp.float32)   # (TB, Gp)

    # First-occurrence argmin (matches torch tie-breaking) without jnp.argmin.
    gp = score.shape[-1]
    iota = lax.broadcasted_iota(jnp.int32, score.shape, 1)            # (TB, Gp)
    smin = jnp.min(score, axis=-1, keepdims=True)                     # (TB, 1)
    first = jnp.min(jnp.where(score <= smin, iota, gp),
                    axis=-1, keepdims=True)                           # (TB, 1)

    # Gather the winning column of center_values via one-hot matmul (MXU):
    # a 0/1 f32 one-hot times f32 cv reproduces cv bit-exactly.
    # TODO(synk): for large G*M this O(TB*Gp*Mp) matmul dominates the distance
    # matmul; swap to an index-in-SMEM + per-row DMA gather from cv (or tile
    # Mp on a second grid axis) when Gp*Mp gets big.
    onehot = (iota == first).astype(jnp.float32)                      # (TB, Gp)
    o_ref[...] = jnp.dot(onehot, cv,
                         preferred_element_type=jnp.float32).astype(o_ref.dtype)


# ---------------------------------------------------------------------------
# Parameter prep (hoisted: paid once per parameter load, not per forward)
# ---------------------------------------------------------------------------
def prepare_params(centers, center_values, *, lane_multiple=None):
    """Transpose / pad / fold the -2 scale / precompute ||c||^2.

    Returns (ct, cn, cv, M)."""
    centers = jnp.asarray(centers, jnp.float32)
    center_values = jnp.asarray(center_values, jnp.float32)
    G, C = centers.shape
    M = center_values.shape[0]                       # 3*K
    Gp = _lane_pad(G, lane_multiple)                 # lane-dense scores / one-hot
    Mp = _lane_pad(M, lane_multiple)                 # lane-dense output

    # Fold the -2 distance scale into the transposed centers: removes a full
    # (TB, Gp) VPU multiply per grid step from the kernel.
    ct = jnp.zeros((C, Gp), jnp.float32).at[:, :G].set((-2.0 * centers).T)
    # Padded centers: largest finite distance -> never selected.  Safe because
    # the padded ct columns are exactly zero and all arithmetic stays in f32.
    cn = jnp.full((1, Gp), jnp.finfo(jnp.float32).max, jnp.float32)
    cn = cn.at[0, :G].set(jnp.sum(centers * centers, axis=1))
    cv = jnp.zeros((Gp, Mp), jnp.float32).at[:G, :M].set(center_values.T)
    return ct, cn, cv, M


def _vmem_limit_bytes(tb, C, Gp, Mp):
    f32 = 4
    resident = (C * Gp + Gp + Gp * Mp) * f32 * 2     # ct/cn/cv (pipeline buffers)
    streamed = (tb * C + tb * Mp) * f32 * 2          # x / out tiles, double-buffered
    temps = 4 * tb * Gp * f32                        # score / iota / mask / one-hot
    est = resident + streamed + temps
    # Clamp to v7x's 64 MiB physical VMEM; never go below the 32 MiB scoped default.
    return int(min(max(2 * est, 32 * 1024 * 1024), 64 * 1024 * 1024))


# ---------------------------------------------------------------------------
# Forward wrappers
# ---------------------------------------------------------------------------
def nearest_center_prepared(x, ct, cn, cv, M, *, tb=None, out_dtype=jnp.float32):
    """x: (B, C) -> (B, M), using pre-padded params from prepare_params().

    out_dtype=jnp.bfloat16 halves the dominant HBM stream (the (B, Mp) output)
    at the cost of rounding the gathered values."""
    B, C = x.shape
    Gp = ct.shape[1]
    Mp = cv.shape[1]

    if tb is None:
        # 256 keeps the (TB, Gp) temporaries vreg/VMEM friendly while still
        # amortizing the ~0.35us per-grid-step overhead.
        tb = min(256, _round_up(B, 8))
    tb = max(8, _round_up(tb, 8))
    # Keep at least 2 grid steps when there's enough batch: the "parallel"
    # axis is how work is sharded across v7x's two TensorCores, and it gives
    # the BlockSpec pipeline something to overlap.
    if B > 8 and _round_up(B, tb) // tb < 2:
        tb = max(8, _round_up(pl.cdiv(B, 2), 8))
    B_pad = _round_up(B, tb)

    x = x.astype(jnp.float32)
    if B_pad != B:                                   # zero-pad tail tile (sliced below)
        x = jnp.zeros((B_pad, C), jnp.float32).at[:B].set(x)

    grid = (B_pad // tb,)
    out = pl.pallas_call(
        nearest_center_kernel,
        out_shape=jax.ShapeDtypeStruct((B_pad, Mp), out_dtype),
        grid_spec=pltpu.PrefetchScalarGridSpec(
            num_scalar_prefetch=0,
            grid=grid,
            in_specs=[
                pl.BlockSpec((tb, C), lambda i: (i, 0)),    # x tile (pipelined)
                # TODO(synk): force single-buffering of the constant-index
                # params (pipeline_mode=pl.Buffered(1)) once verified on this
                # Pallas version; matters only when cv is many MiB (v7x VMEM).
                pl.BlockSpec((C, Gp), lambda i: (0, 0)),    # (-2*centers)^T (resident)
                pl.BlockSpec((1, Gp), lambda i: (0, 0)),    # ||c||^2        (resident)
                pl.BlockSpec((Gp, Mp), lambda i: (0, 0)),   # center_values^T
            ],
            out_specs=pl.BlockSpec((tb, Mp), lambda i: (i, 0)),
        ),
        compiler_params=pltpu.CompilerParams(
            dimension_semantics=("parallel",),
            vmem_limit_bytes=_vmem_limit_bytes(tb, C, Gp, Mp)),
    )(x, ct, cn, cv)

    # Only pay the extra HBM pass of a slice when padding actually happened;
    # consumers that can handle the padded (B_pad, Mp) buffer should take it.
    if B_pad != B or Mp != M:
        out = out[:B, :M]
    return out


def ref_forward(x, centers, center_values):
    # Pure-JAX mirror of the PyTorch forward.
    d = jnp.linalg.norm(centers[None, :, :] - x[:, None, :], axis=2)  # (B, G)
    nearest = jnp.argmin(d, axis=1)                                   # (B,)
    return center_values[:, nearest].T                                # (B, 3K)


def nearest_center(x, centers, center_values, *, tb=None):
    """Convenience wrapper matching the PyTorch forward signature, with a
    small-problem dispatch: at the module's real shapes (C=32, G=3, M=3K) a
    kernel launch is pure overhead and plain XLA wins."""
    B, C = x.shape
    G = centers.shape[0]
    M = center_values.shape[0]
    if B * max(G, 128) * max(M, C) < (1 << 20):      # tiny -> plain XLA
        return ref_forward(x, centers, center_values)
    ct, cn, cv, M = prepare_params(centers, center_values)
    return nearest_center_prepared(x, ct, cn, cv, M, tb=tb)


if __name__ == "__main__":
    # Module hyper-params (small, consistent with __init__):
    context_size = 32
    K = 8
    n_groups = 3
    B = 32

    key = jax.random.PRNGKey(0)
    kx, kc, kv = jax.random.split(key, 3)

    # Module inits params to zeros; use randoms so argmin/gather is exercised.
    x = jax.random.normal(kx, (B, context_size), dtype=jnp.float32)
    centers = jax.random.normal(kc, (n_groups, context_size), dtype=jnp.float32)
    center_values = jax.random.normal(kv, (3 * K, n_groups), dtype=jnp.float32)

    # Hoist parameter prep (transpose / padding / norms / -2 fold).
    ct, cn, cv, M = prepare_params(centers, center_values)

    # Drive the kernel path directly (the nearest_center() wrapper would
    # dispatch this tiny problem to plain XLA).  The tb logic splits B=32 into
    # two 16-row tiles -> a 2-step "parallel" grid.
    out = nearest_center_prepared(x, ct, cn, cv, M)
    out = jax.block_until_ready(out)

    expected = ref_forward(x, centers, center_values)
    assert out.shape == (B, 3 * K), out.shape
    assert jnp.allclose(out, expected, atol=1e-5, rtol=1e-5), "mismatch vs reference"

    print("KERNEL_OK")
</pallas_src>

<mosaic_0001>
module attributes {stable_mosaic.version = 11 : i64} {
  func.func @nearest_center_kernel(%arg0: i32, %arg1: memref<16x32xf32, #tpu.memory_space<vmem>>, %arg2: memref<32x128xf32, #tpu.memory_space<vmem>>, %arg3: memref<1x128xf32, #tpu.memory_space<vmem>>, %arg4: memref<128x128xf32, #tpu.memory_space<vmem>>, %arg5: memref<16x128xf32, #tpu.memory_space<vmem>>) attributes {dimension_semantics = [#tpu.dimension_semantics<parallel>], iteration_bounds = array<i64: 2>, scalar_prefetch = 0 : i64, scratch_operands = 0 : i64, tpu.core_type = #tpu.core_type<tc>, window_params = [{transform_indices = @transform_0, window_bounds = array<i64: 16, 32>}, {pipeline_mode = #tpu.pipeline_mode<synchronous>, transform_indices = @transform_1, window_bounds = array<i64: 32, 128>}, {pipeline_mode = #tpu.pipeline_mode<synchronous>, transform_indices = @transform_2, window_bounds = array<i64: 1, 128>}, {pipeline_mode = #tpu.pipeline_mode<synchronous>, transform_indices = @transform_3, window_bounds = array<i64: 128, 128>}, {transform_indices = @transform_4, window_bounds = array<i64: 16, 128>}]} {
    %c0 = arith.constant 0 : index
    %c0_0 = arith.constant 0 : index
    %0 = vector.load %arg1[%c0, %c0_0] : memref<16x32xf32, #tpu.memory_space<vmem>>, vector<16x32xf32>
    %c0_1 = arith.constant 0 : index
    %c0_2 = arith.constant 0 : index
    %1 = vector.load %arg2[%c0_1, %c0_2] : memref<32x128xf32, #tpu.memory_space<vmem>>, vector<32x128xf32>
    %c0_3 = arith.constant 0 : index
    %c0_4 = arith.constant 0 : index
    %2 = vector.load %arg3[%c0_3, %c0_4] : memref<1x128xf32, #tpu.memory_space<vmem>>, vector<1x128xf32>
    %c0_5 = arith.constant 0 : index
    %c0_6 = arith.constant 0 : index
    %3 = vector.load %arg4[%c0_5, %c0_6] : memref<128x128xf32, #tpu.memory_space<vmem>>, vector<128x128xf32>
    %cst = arith.constant dense<0.000000e+00> : vector<16x128xf32>
    %4 = tpu.matmul %0, %1, %cst {dimension_numbers = #tpu.dot_dimension_numbers<[1], [0], [0], [1], [0, 0, 1, 1], [], []>} : vector<16x32xf32>, vector<32x128xf32>, vector<16x128xf32> -> vector<16x128xf32>
    %5 = vector.broadcast %2 : vector<1x128xf32> to vector<16x128xf32>
    %6 = arith.addf %5, %4 : vector<16x128xf32>
    %7 = tpu.iota {dimensions = array<i32: 1>} : vector<16x128xi32>
    %cst_7 = arith.constant dense<0x7F800000> : vector<16xf32>
    %8 = vector.multi_reduction <minimumf>, %6, %cst_7 [1] : vector<16x128xf32> to vector<16xf32>
    %9 = vector.shape_cast %8 : vector<16xf32> to vector<16x1xf32>
    %10 = vector.broadcast %9 : vector<16x1xf32> to vector<16x128xf32>
    %11 = arith.cmpf ole, %6, %10 : vector<16x128xf32>
    %c128_i32 = arith.constant 128 : i32
    %12 = vector.broadcast %c128_i32 : i32 to vector<16x128xi32>
    %13 = arith.select %11, %7, %12 : vector<16x128xi1>, vector<16x128xi32>
    %cst_8 = arith.constant dense<2147483647> : vector<16xi32>
    %14 = vector.multi_reduction <minsi>, %13, %cst_8 [1] : vector<16x128xi32> to vector<16xi32>
    %15 = vector.shape_cast %14 : vector<16xi32> to vector<16x1xi32>
    %16 = vector.broadcast %15 : vector<16x1xi32> to vector<16x128xi32>
    %17 = arith.cmpi eq, %7, %16 : vector<16x128xi32>
    %18 = arith.extui %17 : vector<16x128xi1> to vector<16x128xi32>
    %19 = arith.sitofp %18 : vector<16x128xi32> to vector<16x128xf32>
    %cst_9 = arith.constant dense<0.000000e+00> : vector<16x128xf32>
    %20 = tpu.matmul %19, %3, %cst_9 {dimension_numbers = #tpu.dot_dimension_numbers<[1], [0], [0], [1], [0, 0, 1, 1], [], []>} : vector<16x128xf32>, vector<128x128xf32>, vector<16x128xf32> -> vector<16x128xf32>
    %c0_10 = arith.constant 0 : index
    %c0_11 = arith.constant 0 : index
    %21 = vector.load %arg5[%c0_10, %c0_11] : memref<16x128xf32, #tpu.memory_space<vmem>>, vector<16x128xf32>
    tpu.vector_store %arg5[%c0_10, %c0_11], %20 {strides = array<i32>} : memref<16x128xf32, #tpu.memory_space<vmem>>, vector<16x128xf32>,
    return
  }
  func.func @transform_0(%arg0: i32) -> (i32, i32) {
    %c0_i32 = arith.constant 0 : i32
    %c0_i32_0 = arith.constant 0 : i32
    return %arg0, %c0_i32 : i32, i32
  }
  func.func @transform_1(%arg0: i32) -> (i32, i32) {
    %c0_i32 = arith.constant 0 : i32
    %c0_i32_0 = arith.constant 0 : i32
    %c0_i32_1 = arith.constant 0 : i32
    return %c0_i32, %c0_i32_0 : i32, i32
  }
  func.func @transform_2(%arg0: i32) -> (i32, i32) {
    %c0_i32 = arith.constant 0 : i32
    %c0_i32_0 = arith.constant 0 : i32
    %c0_i32_1 = arith.constant 0 : i32
    return %c0_i32, %c0_i32_0 : i32, i32
  }
  func.func @transform_3(%arg0: i32) -> (i32, i32) {
    %c0_i32 = arith.constant 0 : i32
    %c0_i32_0 = arith.constant 0 : i32
    %c0_i32_1 = arith.constant 0 : i32
    return %c0_i32, %c0_i32_0 : i32, i32
  }
  func.func @transform_4(%arg0: i32) -> (i32, i32) {
    %c0_i32 = arith.constant 0 : i32
    %c0_i32_0 = arith.constant 0 : i32
    return %arg0, %c0_i32 : i32, i32
  }
}

</mosaic_0001>

<llo_original>
// kernel: tpu_custom_call.1
$region0: #{tpu_custom_call.1}
  #allocation0 [shape = 'u32[]', space=smem, size = 0x4, offset = 0x4, fixed_abs, tag = 'smem constant byte address 0x4 - core index']
  #allocation1 [shape = 'u32[144,128]{1,0:T(1,128)}', space=vmem, size = 0x12000, scoped, tag = 'internal scratch']
  %s0 = inlined_call_operand.hbm [shape: f32[32,32], index: 0, kind: input, shape index: {}]
  %s1 = inlined_call_operand.hbm [shape: f32[32,128], index: 1, kind: input, shape index: {}]
  %s2 = inlined_call_operand.vmem [shape: f32[1,128], index: 2, kind: input, shape index: {}]
  %s3 = inlined_call_operand.hbm [shape: f32[128,128], index: 3, kind: input, shape index: {}]
  %s4 = inlined_call_operand.hbm [shape: f32[32,128], index: 4, kind: output, shape index: {}]
  %s5 = sld [smem:[#allocation0]]
  $region61: #{tpu_custom_call.1} parent=0
    _
  %s7 = ssub.s32 1, %s5
  %s8 = scalar_select 0, %s7, %s5
  $region1: #{tpu_custom_call.1} parent=0
    #allocation2 [shape = 'u8[16384]{0}', space=vmem, size = 0x4000, scoped, tag = 'input window, operand 0']
    #allocation3 [shape = 's32[2]{0}', space=sflag, size = 0x8, scoped, tag = 'scoped memory for tpu_custom_call.1']
    #allocation4 [shape = 's32[2]{0}', space=sflag, size = 0x8, scoped, tag = 'scoped memory for tpu_custom_call.1']
    #allocation5 [shape = 'u8[16384]{0}', space=vmem, size = 0x4000, scoped, tag = 'input window, operand 1, single buffered']
    #allocation6 [shape = 's32[1]{0}', space=sflag, size = 0x4, scoped, tag = 'scoped memory for tpu_custom_call.1']
    #allocation7 [shape = 'u8[65536]{0}', space=vmem, size = 0x10000, scoped, tag = 'input window, operand 3, single buffered']
    #allocation8 [shape = 'u8[16384]{0}', space=vmem, size = 0x4000, scoped, tag = 'output window, operand 0']
    %9 = vsyncpa [#allocation3], 0
    %s10 = scalar_lea.sflag [#allocation3], 1
    %11 = vsyncpa %s10, 0
    %12 = vsyncpa [#allocation6], 0
    %13 = vsyncpa [#allocation4], 0
    %s14 = scalar_lea.sflag [#allocation4], 1
    %15 = vsyncpa %s14, 0
    loop: start=0, step=1, limit=4
    $region2: #{tpu_custom_call.1} parent=1 // loop_pre_header
      _
    $region3: #{tpu_custom_call.1} parent=1 // loop_header
      %s17 = sphi 0, %s21
      %p18 = scmp.ge.s32.totalorder %s17, 4
      %s27 = sphi 0, %s29
      %s30 = sphi 0, %s27
      %s31 = sphi 0, %s30
      %s47 = sphi 0, %s31
      %s51 = sphi 0, %s51
      %s53 = sphi 0, %s51
      %s54 = sphi 0, %s53
      %s68 = sphi 0, %s54
      %s72 = sphi 0, %s72
      %s74 = sphi 0, %s72
      %s75 = sphi 0, %s74
      %s89 = sphi 0, %s75
      %s93 = sphi 0, %s93
      %s95 = sphi 0, %s93
      %s96 = sphi 0, %s95
      %s110 = sphi 0, %s96
      %s116 = sphi 0, %s118
      %s119 = sphi 0, %s116
      %s120 = sphi 0, %s119
      %s136 = sphi 0, %s120
    $region4: #{tpu_custom_call.1} parent=1 // loop_header_branch
      %20 = sbr.rel (%p18) target = $region8
    $region5: #{tpu_custom_call.1} parent=1 // loop_body
      %s22 = ssub.s32 %s17, 1
      %s23 = ssub.s32 %s17, 2
      %s24 = sadd.s32 %s17, 1
      %s25 = ssub.s32 %s17, %s24
      %p26 = scmp.eq.s32.totalorder %s25, 0
      %s28 = sadd.s32 %s27, 1
      %s29 = scalar_select %p26, %s27, %s28
      %p32 = pneg %p26
      %p33 = scmp.eq.s32.totalorder %s17, 1
      %p34 = por %p32, %p33
      %p35 = scmp.ne.s32.totalorder %s27, %s30
      %p36 = scmp.eq.s32.totalorder %s17, 0
      %p37 = por %p35, %p36
      %p38 = scmp.ne.s32.totalorder %s27, %s30
      %p39 = scmp.eq.s32.totalorder %s22, 1
      %p40 = por %p38, %p39
      %p41 = scmp.ne.s32.totalorder %s30, %s31
      %p42 = scmp.eq.s32.totalorder %s22, 0
      %p43 = por %p41, %p42
      %p44 = scmp.ne.s32.totalorder %s30, %s31
      %p45 = scmp.eq.s32.totalorder %s23, 1
      %p46 = por %p44, %p45
      %p48 = scmp.ne.s32.totalorder %s31, %s47
      %p49 = scmp.eq.s32.totalorder %s23, 0
      %p50 = por %p48, %p49
      %s52 = sadd.s32 %s51, 1
      %p55 = scmp.eq.s32.totalorder %s17, 1
      %p56 = scmp.ne.s32.totalorder %s51, %s53
      %p57 = scmp.eq.s32.totalorder %s17, 0
      %p58 = por %p56, %p57
      %p59 = scmp.ne.s32.totalorder %s51, %s53
      %p60 = scmp.eq.s32.totalorder %s22, 1
      %p61 = por %p59, %p60
      %p62 = scmp.ne.s32.totalorder %s53, %s54
      %p63 = scmp.eq.s32.totalorder %s22, 0
      %p64 = por %p62, %p63
      %p65 = scmp.ne.s32.totalorder %s53, %s54
      %p66 = scmp.eq.s32.totalorder %s23, 1
      %p67 = por %p65, %p66
      %p69 = scmp.ne.s32.totalorder %s54, %s68
      %p70 = scmp.eq.s32.totalorder %s23, 0
      %p71 = por %p69, %p70
      %s73 = sadd.s32 %s72, 1
      %p76 = scmp.eq.s32.totalorder %s17, 1
      %p77 = scmp.ne.s32.totalorder %s72, %s74
      %p78 = scmp.eq.s32.totalorder %s17, 0
      %p79 = por %p77, %p78
      %p80 = scmp.ne.s32.totalorder %s72, %s74
      %p81 = scmp.eq.s32.totalorder %s22, 1
      %p82 = por %p80, %p81
      %p83 = scmp.ne.s32.totalorder %s74, %s75
      %p84 = scmp.eq.s32.totalorder %s22, 0
      %p85 = por %p83, %p84
      %p86 = scmp.ne.s32.totalorder %s74, %s75
      %p87 = scmp.eq.s32.totalorder %s23, 1
      %p88 = por %p86, %p87
      %p90 = scmp.ne.s32.totalorder %s75, %s89
      %p91 = scmp.eq.s32.totalorder %s23, 0
      %p92 = por %p90, %p91
      %s94 = sadd.s32 %s93, 1
      %p97 = scmp.eq.s32.totalorder %s17, 1
      %p98 = scmp.ne.s32.totalorder %s93, %s95
      %p99 = scmp.eq.s32.totalorder %s17, 0
      %p100 = por %p98, %p99
      %p101 = scmp.ne.s32.totalorder %s93, %s95
      %p102 = scmp.eq.s32.totalorder %s22, 1
      %p103 = por %p101, %p102
      %p104 = scmp.ne.s32.totalorder %s95, %s96
      %p105 = scmp.eq.s32.totalorder %s22, 0
      %p106 = por %p104, %p105
      %p107 = scmp.ne.s32.totalorder %s95, %s96
      %p108 = scmp.eq.s32.totalorder %s23, 1
      %p109 = por %p107, %p108
      %p111 = scmp.ne.s32.totalorder %s96, %s110
      %p112 = scmp.eq.s32.totalorder %s23, 0
      %p113 = por %p111, %p112
      %s114 = ssub.s32 %s17, %s24
      %p115 = scmp.eq.s32.totalorder %s114, 0
      %s117 = sadd.s32 %s116, 1
      %s118 = scalar_select %p115, %s116, %s117
      %p121 = pneg %p115
      %p122 = scmp.eq.s32.totalorder %s17, 1
      %p123 = por %p121, %p122
      %p124 = scmp.ne.s32.totalorder %s116, %s119
      %p125 = scmp.eq.s32.totalorder %s17, 0
      %p126 = por %p124, %p125
      %p127 = scmp.ne.s32.totalorder %s116, %s119
      %p128 = scmp.eq.s32.totalorder %s22, 1
      %p129 = por %p127, %p128
      %p130 = scmp.ne.s32.totalorder %s119, %s120
      %p131 = scmp.eq.s32.totalorder %s22, 0
      %p132 = por %p130, %p131
      %p133 = scmp.ne.s32.totalorder %s119, %s120
      %p134 = scmp.eq.s32.totalorder %s23, 1
      %p135 = por %p133, %p134
      %p137 = scmp.ne.s32.totalorder %s120, %s136
      %p138 = scmp.eq.s32.totalorder %s23, 0
      %p139 = por %p137, %p138
      %p140 = scmp.le.s32.totalorder 1, %s17
      %p141 = scmp.lt.s32.totalorder %s17, 3
      %p142 = pnand %p140, %p141
      %p143 = pneg %p142
      // Predicated region
      $region9: #{tpu_custom_call.1} parent=5 // pred_check
        _
      $region10: #{tpu_custom_call.1} parent=5 // pred_check_branch
        %145 = sbr.rel (%p142) target = $region12
      $region11: #{tpu_custom_call.1} parent=5 // pred_region
        %s146 = ssub.s32 %s17, 1
        // Predicated region
        $region13: #{tpu_custom_call.1} parent=11 // pred_check
          %p147 = pneg %p64
        $region14: #{tpu_custom_call.1} parent=11 // pred_check_branch
          %149 = sbr.rel (%p147) target = $region16
        $region15: #{tpu_custom_call.1} parent=11 // pred_region
          %s151 = ssub.s32 512, 512
          %152 = vsyncadd [#allocation6], %s151
          %s153 = sshll.u32 [#allocation5], 4
          %s154 = int_to_ptr.vmem [resolvable:$true] %s153
          %159 = dma.hbm_to_vmem [thread:$0]  %s1, 512, %s154, [#allocation6], 128, 128, 8
        $region16: #{tpu_custom_call.1} parent=11 // pred_fallthru
          _
        // Predicated region
        $region17: #{tpu_custom_call.1} parent=11 // pred_check
          %p160 = pneg %p85
        $region18: #{tpu_custom_call.1} parent=11 // pred_check_branch
          %162 = sbr.rel (%p160) target = $region20
        $region19: #{tpu_custom_call.1} parent=11 // pred_region
          _
        $region20: #{tpu_custom_call.1} parent=11 // pred_fallthru
          _
        // Predicated region
        $region21: #{tpu_custom_call.1} parent=11 // pred_check
          %p163 = pneg %p106
        $region22: #{tpu_custom_call.1} parent=11 // pred_check_branch
          %165 = sbr.rel (%p163) target = $region24
        $region23: #{tpu_custom_call.1} parent=11 // pred_region
          %s167 = ssub.s32 2048, 2048
          %168 = vsyncadd [#allocation6], %s167
          %s169 = sshll.u32 [#allocation7], 4
          %s170 = int_to_ptr.vmem [resolvable:$true] %s169
          %175 = dma.hbm_to_vmem [thread:$0]  %s3, 2048, %s170, [#allocation6], 128, 128, 8
        $region24: #{tpu_custom_call.1} parent=11 // pred_fallthru
          _
      $region12: #{tpu_custom_call.1} parent=5 // pred_fallthru
        _
      %p176 = scmp.lt.s32.totalorder %s17, 2
      // Predicated region
      $region25: #{tpu_custom_call.1} parent=5 // pred_check
        %p177 = pneg %p176
      $region26: #{tpu_custom_call.1} parent=5 // pred_check_branch
        %179 = sbr.rel (%p177) target = $region28
      $region27: #{tpu_custom_call.1} parent=5 // pred_region
        // Predicated region
        $region29: #{tpu_custom_call.1} parent=27 // pred_check
          %p180 = pneg %p37
        $region30: #{tpu_custom_call.1} parent=27 // pred_check_branch
          %182 = sbr.rel (%p180) target = $region32
        $region31: #{tpu_custom_call.1} parent=27 // pred_region
          %s183 = sand.u32 %s27, 1
          %s184 = scalar_lea.sflag [#allocation3], %s183
          %s185 = sand.u32 %s27, 1
          %s186 = smul.addr %s185, 16
          %s187 = scalar_lea.vmem [#allocation2], %s186
          %s188 = smul.u32 2, %s17
          %s190 = ssub.s32 256, 256
          %191 = vsyncadd %s184, %s190
          %s192 = smul.addr %s188, 128
          %s193 = scalar_lea.hbm %s0, %s192
          %s194 = sshll.u32 %s187, 4
          %s195 = int_to_ptr.vmem [resolvable:$true] %s194
          %200 = dma.hbm_to_vmem [thread:$0]  %s193, 256, %s195, %s184, 128, 128, 8
        $region32: #{tpu_custom_call.1} parent=27 // pred_fallthru
          _
      $region28: #{tpu_custom_call.1} parent=5 // pred_fallthru
        _
      %p201 = scmp.le.s32.totalorder 1, %s17
      %p202 = scmp.lt.s32.totalorder %s17, 3
      %p203 = pnand %p201, %p202
      %p204 = pneg %p203
      // Predicated region
      $region33: #{tpu_custom_call.1} parent=5 // pred_check
        _
      $region34: #{tpu_custom_call.1} parent=5 // pred_check_branch
        %206 = sbr.rel (%p203) target = $region36
      $region35: #{tpu_custom_call.1} parent=5 // pred_region
        %s207 = ssub.s32 %s17, 1
        %s208 = sand.u32 %s30, 1
        %s209 = scalar_lea.sflag [#allocation3], %s208
        %s210 = sand.u32 %s30, 1
        %s211 = smul.addr %s210, 16
        %s212 = scalar_lea.vmem [#allocation2], %s211
        // Predicated region
        $region37: #{tpu_custom_call.1} parent=35 // pred_check
          %p213 = pneg %p43
        $region38: #{tpu_custom_call.1} parent=35 // pred_check_branch
          %215 = sbr.rel (%p213) target = $region40
        $region39: #{tpu_custom_call.1} parent=35 // pred_region
          %216 = dma.done %s209, 256
        $region40: #{tpu_custom_call.1} parent=35 // pred_fallthru
          _
        // Predicated region
        $region41: #{tpu_custom_call.1} parent=35 // pred_check
          %p217 = pneg %p64
        $region42: #{tpu_custom_call.1} parent=35 // pred_check_branch
          %219 = sbr.rel (%p217) target = $region44
        $region43: #{tpu_custom_call.1} parent=35 // pred_region
          %220 = dma.done [#allocation6], 512
        $region44: #{tpu_custom_call.1} parent=35 // pred_fallthru
          _
        // Predicated region
        $region45: #{tpu_custom_call.1} parent=35 // pred_check
          %p221 = pneg %p106
        $region46: #{tpu_custom_call.1} parent=35 // pred_check_branch
          %223 = sbr.rel (%p221) target = $region48
        $region47: #{tpu_custom_call.1} parent=35 // pred_region
          %224 = dma.done [#allocation6], 2048
        $region48: #{tpu_custom_call.1} parent=35 // pred_fallthru
          _
        %s225 = sand.u32 %s30, 1
        %s226 = scalar_lea.sflag [#allocation3], %s225
        %s227 = sand.u32 %s30, 1
        %s228 = smul.addr %s227, 16
        %s229 = scalar_lea.vmem [#allocation2], %s228
        %p230 = pneg %p43
        %p231 = pneg %p40
        %p232 = pneg %p64
        %p233 = pneg %p61
        %p234 = pneg %p85
        %p235 = pneg %p82
        %p236 = pneg %p106
        %p237 = pneg %p103
        %p238 = pneg %p132
        %p239 = pneg %p129
        %s240 = sand.u32 %s119, 1
        %s241 = scalar_lea.sflag [#allocation4], %s240
        %s242 = sand.u32 %s119, 1
        %s243 = smul.addr %s242, 16
        %s244 = scalar_lea.vmem [#allocation8], %s243
        %s245 = smul.u32 2, %s22
        %s246 = smul.u32 2, %s22
        %v247 = vld [vmem:[%s212] sm:$0xff]
        %v248 = vld [vmem:[%s212 + $0x8] sm:$0xff]
        %v249 = vld [vmem:[#allocation5] sm:$0xff]
        %v250 = vld [vmem:[#allocation5 + $0x8] sm:$0xff]
        %v251 = vld [vmem:[#allocation5 + $0x10] sm:$0xff]
        %v252 = vld [vmem:[#allocation5 + $0x18] sm:$0xff]
        %v253 = vld [vmem:[%s2] sm:$0x1]
        %v254 = vld [vmem:[#allocation7] sm:$0xff]
        %v255 = vld [vmem:[#allocation7 + $0x8] sm:$0xff]
        %v256 = vld [vmem:[#allocation7 + $0x10] sm:$0xff]
        %v257 = vld [vmem:[#allocation7 + $0x18] sm:$0xff]
        %v258 = vld [vmem:[#allocation7 + $0x20] sm:$0xff]
        %v259 = vld [vmem:[#allocation7 + $0x28] sm:$0xff]
        %v260 = vld [vmem:[#allocation7 + $0x30] sm:$0xff]
        %v261 = vld [vmem:[#allocation7 + $0x38] sm:$0xff]
        %v262 = vld [vmem:[#allocation7 + $0x40] sm:$0xff]
        %v263 = vld [vmem:[#allocation7 + $0x48] sm:$0xff]
        %v264 = vld [vmem:[#allocation7 + $0x50] sm:$0xff]
        %v265 = vld [vmem:[#allocation7 + $0x58] sm:$0xff]
        %v266 = vld [vmem:[#allocation7 + $0x60] sm:$0xff]
        %v267 = vld [vmem:[#allocation7 + $0x68] sm:$0xff]
        %v268 = vld [vmem:[#allocation7 + $0x70] sm:$0xff]
        %v269 = vld [vmem:[#allocation7 + $0x78] sm:$0xff]
        %vm270 = vcmask 261120
        %v272 = vsel %vm270, %v247, 0
        %v275 = vsel %vm270, %v248, 0
        %277 = vmatprep.subr.mxu0 0.0
        %278 = vmatpush1.msra.mxu0 0.0
        %279 = vmatprep.subr.mxu0 0.0
        %280 = vmatpush1.msra.mxu0 0.0
        %281 = vmatprep.subr.mxu0 0.0
        %282 = vmatpush1.msra.mxu0 0.0
        %283 = vmatprep.subr.mxu0 0.0
        %284 = vmatpush1.msra.mxu0 0.0
        %285 = vmatprep.subr.mxu0 0.0
        %286 = vmatpush1.msra.mxu0 0.0
        %287 = vmatprep.subr.mxu0 0.0
        %288 = vmatpush1.msra.mxu0 0.0
        %289 = vmatprep.subr.mxu0 0.0
        %290 = vmatpush1.msra.mxu0 0.0
        %291 = vmatprep.subr.mxu0 0.0
        %292 = vmatpush1.msra.mxu0 0.0
        %293 = vmatprep.subr.mxu0 0.0
        %294 = vmatpush1.msra.mxu0 0.0
        %295 = vmatprep.subr.mxu0 0.0
        %296 = vmatpush1.msra.mxu0 0.0
        %297 = vmatprep.subr.mxu0 0.0
        %298 = vmatpush1.msra.mxu0 0.0
        %299 = vmatprep.subr.mxu0 0.0
        %300 = vmatpush1.msra.mxu0 0.0
        %301 = vmatprep.subr.mxu0 0.0
        %302 = vmatpush1.msra.mxu0 %v252
        %303 = vmatprep.subr.mxu0 0.0
        %304 = vmatpush1.msra.mxu0 %v251
        %305 = vmatprep.subr.mxu0 0.0
        %306 = vmatpush1.msra.mxu0 %v250
        %307 = vmatprep.subr.mxu0 0.0
        %308 = vmatpush1.msra.mxu0 %v249
        %309 = vmatprep.subr.mxu0 0.0
        %310 = vmatpush2.msra.mxu0 0.0
        %311 = vmatprep.subr.mxu0 0.0
        %312 = vmatpush2.msra.mxu0 0.0
        %313 = vmatprep.subr.mxu0 0.0
        %314 = vmatpush2.msra.mxu0 0.0
        %315 = vmatprep.subr.mxu0 0.0
        %316 = vmatpush2.msra.mxu0 0.0
        %317 = vmatprep.subr.mxu0 0.0
        %318 = vmatpush2.msra.mxu0 0.0
        %319 = vmatprep.subr.mxu0 0.0
        %320 = vmatpush2.msra.mxu0 0.0
        %321 = vmatprep.subr.mxu0 0.0
        %322 = vmatpush2.msra.mxu0 0.0
        %323 = vmatprep.subr.mxu0 0.0
        %324 = vmatpush2.msra.mxu0 0.0
        %325 = vmatprep.subr.mxu0 0.0
        %326 = vmatpush2.msra.mxu0 0.0
        %327 = vmatprep.subr.mxu0 0.0
        %328 = vmatpush2.msra.mxu0 0.0
        %329 = vmatprep.subr.mxu0 0.0
        %330 = vmatpush2.msra.mxu0 0.0
        %331 = vmatprep.subr.mxu0 0.0
        %332 = vmatpush2.msra.mxu0 0.0
        %333 = vmatprep.subr.mxu0 0.0
        %334 = vmatpush2.msra.mxu0 0.0
        %335 = vmatprep.subr.mxu0 0.0
        %336 = vmatpush2.msra.mxu0 0.0
        %337 = vmatprep.subr.mxu0 0.0
        %338 = vmatpush2.msra.mxu0 0.0
        %339 = vmatprep.subr.mxu0 0.0
        %340 = vmatpush2.msra.mxu0 0.0
        %341 = vmatprep.mubr.f32.mxu0 0.0
        %342 = vmatmul.mubr.f32.gmra.mxu0 %v272
        %v343 = vpop.f32.mrf.mxu0
        %v344 = vadd.f32 0.0, %v343
        %v345 = vpop.f32.mrf.mxu0
        %346 = vmatprep.mubr.f32.mxu0 0.0
        %347 = vmatmul.mubr.f32.gmra.mxu0 %v275
        %v348 = vpop.f32.mrf.mxu0
        %v349 = vadd.f32 0.0, %v348
        %v350 = vpop.f32.mrf.mxu0
        %351 = vdwg.mxu0
        %v353 = vlaneseq
        %v354 = vshrl.u32 %v353, 7
        %v355 = vsub.s32 0, %v354
        %v356 = vrot.slane %v253, %v355
        %v358 = vadd.f32 %v356, %v344
        %v359 = vadd.f32 %v356, %v349
        %v360 = vlaneseq
        %v361 = vand.u32 %v360, 127
        %362 = vmin.xlane.f32.xlu0 %v358
        %v363 = vpop.xlane.xlu0 %362
        %364 = vmin.xlane.f32.xlu0 %v359
        %v365 = vpop.xlane.xlu0 %364
        %vm366 = vcmp.le.f32.partialorder %v358, %v363
        %vm367 = vcmp.le.f32.partialorder %v359, %v365
        %v368 = vsel %vm366, %v361, 128
        %v369 = vsel %vm367, %v361, 128
        %v370 = vand.u32 %v368, 65535
        %v371 = vshra.s32 %v368, 16
        %v372 = vcvt.s32.f32 %v370
        %v373 = vcvt.s32.f32 %v371
        %374 = vmin.xlane.f32.xlu0 %v373
        %v375 = vpop.xlane.xlu0 %374
        %vm376 = vcmp.eq.f32.partialorder %v373, %v375
        %v377 = vsel %vm376, %v372, inf
        %378 = vmin.xlane.f32.xlu0 %v377
        %v379 = vpop.xlane.xlu0 %378
        %v380 = vcvt.f32.s32 %v379
        %v381 = vcvt.f32.s32 %v375
        %v382 = vshll.u32 %v381, 16
        %v383 = vadd.s32 %v382, %v380
        %v384 = vand.u32 %v369, 65535
        %v385 = vshra.s32 %v369, 16
        %v386 = vcvt.s32.f32 %v384
        %v387 = vcvt.s32.f32 %v385
        %388 = vmin.xlane.f32.xlu0 %v387
        %v389 = vpop.xlane.xlu0 %388
        %vm390 = vcmp.eq.f32.partialorder %v387, %v389
        %v391 = vsel %vm390, %v386, inf
        %392 = vmin.xlane.f32.xlu0 %v391
        %v393 = vpop.xlane.xlu0 %392
        %v394 = vcvt.f32.s32 %v393
        %v395 = vcvt.f32.s32 %v389
        %v396 = vshll.u32 %v395, 16
        %v397 = vadd.s32 %v396, %v394
        %vm398 = vcmp.eq.s32.totalorder %v361, %v383
        %vm399 = vcmp.eq.s32.totalorder %v361, %v397
        %v400 = vsel %vm398, 1, 0
        %v401 = vsel %vm399, 1, 0
        %v402 = vcvt.s32.f32 %v400
        %v403 = vcvt.s32.f32 %v401
        %404 = vmatprep.subr.mxu0 0.0
        %405 = vmatpush1.msra.mxu0 %v269
        %406 = vmatprep.subr.mxu0 0.0
        %407 = vmatpush1.msra.mxu0 %v268
        %408 = vmatprep.subr.mxu0 0.0
        %409 = vmatpush1.msra.mxu0 %v267
        %410 = vmatprep.subr.mxu0 0.0
        %411 = vmatpush1.msra.mxu0 %v266
        %412 = vmatprep.subr.mxu0 0.0
        %413 = vmatpush1.msra.mxu0 %v265
        %414 = vmatprep.subr.mxu0 0.0
        %415 = vmatpush1.msra.mxu0 %v264
        %416 = vmatprep.subr.mxu0 0.0
        %417 = vmatpush1.msra.mxu0 %v263
        %418 = vmatprep.subr.mxu0 0.0
        %419 = vmatpush1.msra.mxu0 %v262
        %420 = vmatprep.subr.mxu0 0.0
        %421 = vmatpush1.msra.mxu0 %v261
        %422 = vmatprep.subr.mxu0 0.0
        %423 = vmatpush1.msra.mxu0 %v260
        %424 = vmatprep.subr.mxu0 0.0
        %425 = vmatpush1.msra.mxu0 %v259
        %426 = vmatprep.subr.mxu0 0.0
        %427 = vmatpush1.msra.mxu0 %v258
        %428 = vmatprep.subr.mxu0 0.0
        %429 = vmatpush1.msra.mxu0 %v257
        %430 = vmatprep.subr.mxu0 0.0
        %431 = vmatpush1.msra.mxu0 %v256
        %432 = vmatprep.subr.mxu0 0.0
        %433 = vmatpush1.msra.mxu0 %v255
        %434 = vmatprep.subr.mxu0 0.0
        %435 = vmatpush1.msra.mxu0 %v254
        %436 = vmatprep.subr.mxu0 0.0
        %437 = vmatpush2.msra.mxu0 0.0
        %438 = vmatprep.subr.mxu0 0.0
        %439 = vmatpush2.msra.mxu0 0.0
        %440 = vmatprep.subr.mxu0 0.0
        %441 = vmatpush2.msra.mxu0 0.0
        %442 = vmatprep.subr.mxu0 0.0
        %443 = vmatpush2.msra.mxu0 0.0
        %444 = vmatprep.subr.mxu0 0.0
        %445 = vmatpush2.msra.mxu0 0.0
        %446 = vmatprep.subr.mxu0 0.0
        %447 = vmatpush2.msra.mxu0 0.0
        %448 = vmatprep.subr.mxu0 0.0
        %449 = vmatpush2.msra.mxu0 0.0
        %450 = vmatprep.subr.mxu0 0.0
        %451 = vmatpush2.msra.mxu0 0.0
        %452 = vmatprep.subr.mxu0 0.0
        %453 = vmatpush2.msra.mxu0 0.0
        %454 = vmatprep.subr.mxu0 0.0
        %455 = vmatpush2.msra.mxu0 0.0
        %456 = vmatprep.subr.mxu0 0.0
        %457 = vmatpush2.msra.mxu0 0.0
        %458 = vmatprep.subr.mxu0 0.0
        %459 = vmatpush2.msra.mxu0 0.0
        %460 = vmatprep.subr.mxu0 0.0
        %461 = vmatpush2.msra.mxu0 0.0
        %462 = vmatprep.subr.mxu0 0.0
        %463 = vmatpush2.msra.mxu0 0.0
        %464 = vmatprep.subr.mxu0 0.0
        %465 = vmatpush2.msra.mxu0 0.0
        %466 = vmatprep.subr.mxu0 0.0
        %467 = vmatpush2.msra.mxu0 0.0
        %468 = vmatprep.mubr.f32.mxu0 0.0
        %469 = vmatmul.mubr.f32.gmra.mxu0 %v402
        %v470 = vpop.f32.mrf.mxu0
        %v471 = vadd.f32 0.0, %v470
        %v472 = vpop.f32.mrf.mxu0
        %473 = vmatprep.mubr.f32.mxu0 0.0
        %474 = vmatmul.mubr.f32.gmra.mxu0 %v403
        %v475 = vpop.f32.mrf.mxu0
        %v476 = vadd.f32 0.0, %v475
        %v477 = vpop.f32.mrf.mxu0
        %478 = vdwg.mxu0
        %479 = vst [vmem:[%s244] sm:$0xff] %v471
        %480 = vst [vmem:[%s244 + $0x8] sm:$0xff] %v476
        %s481 = sand.u32 %s119, 1
        %s482 = scalar_lea.sflag [#allocation4], %s481
        %s483 = sand.u32 %s119, 1
        %s484 = smul.addr %s483, 16
        %s485 = scalar_lea.vmem [#allocation8], %s484
        // Predicated region
        $region49: #{tpu_custom_call.1} parent=35 // pred_check
          %p486 = pneg %p129
        $region50: #{tpu_custom_call.1} parent=35 // pred_check_branch
          %488 = sbr.rel (%p486) target = $region52
        $region51: #{tpu_custom_call.1} parent=35 // pred_region
          %s489 = smul.u32 2, %s22
          %s491 = ssub.s32 256, 256
          %492 = vsyncadd %s482, %s491
          %s493 = smul.addr %s489, 128
          %s494 = scalar_lea.hbm %s4, %s493
          %s495 = sshll.u32 %s485, 4
          %s496 = int_to_ptr.vmem [resolvable:$true] %s495
          %501 = dma.vmem_to_hbm [thread:$0]  %s496, 256, %s494, %s482, 128, 128, 8
        $region52: #{tpu_custom_call.1} parent=35 // pred_fallthru
          _
      $region36: #{tpu_custom_call.1} parent=5 // pred_fallthru
        _
      %p502 = scmp.le.s32.totalorder 2, %s17
      // Predicated region
      $region53: #{tpu_custom_call.1} parent=5 // pred_check
        %p503 = pneg %p502
      $region54: #{tpu_custom_call.1} parent=5 // pred_check_branch
        %505 = sbr.rel (%p503) target = $region56
      $region55: #{tpu_custom_call.1} parent=5 // pred_region
        %s506 = ssub.s32 %s17, 2
        // Predicated region
        $region57: #{tpu_custom_call.1} parent=55 // pred_check
          %p507 = pneg %p135
        $region58: #{tpu_custom_call.1} parent=55 // pred_check_branch
          %509 = sbr.rel (%p507) target = $region60
        $region59: #{tpu_custom_call.1} parent=55 // pred_region
          %s510 = sand.u32 %s120, 1
          %s511 = scalar_lea.sflag [#allocation4], %s510
          %s512 = sand.u32 %s120, 1
          %s513 = smul.addr %s512, 16
          %s514 = scalar_lea.vmem [#allocation8], %s513
          %515 = dma.done %s511, 256
        $region60: #{tpu_custom_call.1} parent=55 // pred_fallthru
          _
      $region56: #{tpu_custom_call.1} parent=5 // pred_fallthru
        _
    $region6: #{tpu_custom_call.1} parent=1 // loop_footer
      %s21 = sadd.s32 1, %s17
    $region7: #{tpu_custom_call.1} parent=1 // loop_footer_branch
      %16 = sbr.rel target = $region3
    $region8: #{tpu_custom_call.1} parent=1 // loop_exit
      _
    %516 = vsyncpa [#allocation3], 1
    %s517 = scalar_lea.sflag [#allocation3], 1
    %518 = vsyncpa %s517, 1
    %519 = vsyncpa [#allocation6], 1
    %520 = vsyncpa [#allocation4], 1
    %s521 = scalar_lea.sflag [#allocation4], 1
    %522 = vsyncpa %s521, 1

</llo_original>
